<compile_context>
chip_gen: v5e
topology: v5e:2x2
jax: 0.10.0
libtpu: 0.0.40
codegen_flags: <defaults>
</compile_context>

<pallas_src>
import functools

import jax
import jax.numpy as jnp
from jax.experimental import pallas as pl
from jax.experimental.pallas import tpu as pltpu

EPS = 1e-08


def _round_up(x, m):
    return ((x + m - 1) // m) * m


def _selector_kernel(ids_ref, table_ref, out_ref, *, n_splits, n_experts):
    # ids_ref:   (1, BT)        int32 — task id per batch element in this tile
    # table_ref: (F, n_rows)    f32   — module_logits transposed, F = n_splits*n_experts
    # out_ref:   (F, BT)        f32   — normalized routing weights, batch on lanes
    ids = ids_ref[...]                               # (1, BT)
    table = table_ref[...].astype(jnp.float32)       # (F, n_rows)
    f, n_rows = table.shape
    bt = ids.shape[1]

    # Row gather as a one-hot matmul on the MXU.  The one-hot matrix is exactly
    # 0/1 and precision=HIGHEST keeps the full f32 mantissa of the (tiny) table,
    # so the gathered logits are bit-exact.
    row_iota = jax.lax.broadcasted_iota(jnp.int32, (n_rows, bt), 0)
    onehot = (row_iota == ids).astype(jnp.float32)   # (n_rows, BT)
    logits_t = jnp.dot(table, onehot,
                       preferred_element_type=jnp.float32,
                       precision=jax.lax.Precision.HIGHEST)   # (F, BT)

    sig = jax.nn.sigmoid(logits_t)                   # (F, BT), EUP

    # Normalize each split's expert group: (F, BT) -> (n_splits, n_experts, BT),
    # sublane reduce over the expert axis, broadcast-multiply by the reciprocal,
    # and a single full-block lane-dense store.
    sig3 = sig.reshape(n_splits, n_experts, bt)
    denom = jnp.sum(sig3, axis=1, keepdims=True) + EPS        # (n_splits, 1, BT)
    weights = sig3 * pl.reciprocal(denom, approx=False)
    out_ref[...] = weights.reshape(f, bt)


def poly_selector_forward(module_logits, task_ids, n_splits, n_experts,
                          *, block_batch=512):
    """module_logits: (n_tasks+1, n_splits*n_experts) float32
       task_ids:      (batch,) int32 — indices into module_logits rows
       returns:       (batch, n_splits, n_experts) float32 routing weights
    """
    n_rows, feat = module_logits.shape
    assert feat == n_splits * n_experts
    batch = task_ids.shape[0]

    # Batch tile (lane axis): multiple of 128, capped at block_batch.
    bt = min(block_batch, _round_up(batch, 128))
    padded = _round_up(batch, bt)
    grid = (padded // bt,)

    # Pad task ids with the (all-zero) last row; padded outputs are sliced away.
    ids = jnp.full((padded,), n_rows - 1, dtype=jnp.int32)
    ids = ids.at[:batch].set(task_ids.astype(jnp.int32))
    ids2d = ids.reshape(1, padded)

    table_t = module_logits.astype(jnp.float32).T    # (feat, n_rows) — tiny, VMEM-resident

    kernel = functools.partial(_selector_kernel, n_splits=n_splits, n_experts=n_experts)

    out_t = pl.pallas_call(
        kernel,
        out_shape=jax.ShapeDtypeStruct((feat, padded), jnp.float32),
        grid_spec=pltpu.PrefetchScalarGridSpec(
            num_scalar_prefetch=0,
            grid=grid,
            in_specs=[
                pl.BlockSpec((1, bt), lambda t: (0, t)),           # task ids (lane-major)
                pl.BlockSpec((feat, n_rows), lambda t: (0, 0)),    # full logits table
            ],
            out_specs=pl.BlockSpec((feat, bt), lambda t: (0, t)),  # lane-dense output
        ),
        compiler_params=pltpu.CompilerParams(
            dimension_semantics=("parallel",),
        ),
    )(ids2d, table_t)

    # (feat, padded) -> (batch, n_splits, n_experts)
    return out_t[:, :batch].T.reshape(batch, n_splits, n_experts)


def poly_selector_reference(module_logits, task_ids, n_splits, n_experts):
    logits = module_logits[task_ids]                          # (B, n_splits*n_experts)
    sig = jax.nn.sigmoid(logits).reshape(-1, n_splits, n_experts)
    return sig / (jnp.sum(sig, axis=-1, keepdims=True) + EPS)


if __name__ == "__main__":
    # Module hyperparameters (small, deterministic).
    n_tasks = 3          # len(config.task_names)
    n_splits = 4         # config.n_splits
    n_experts = 8        # number of experts added via add_expert
    batch = 2

    key = jax.random.PRNGKey(0)
    k_logits, k_ids, k_ids2 = jax.random.split(key, 3)

    # nn.Parameter(torch.empty(n_tasks+1, n_splits*n_experts).uniform_(-0.001, 0.001))
    module_logits = jax.random.uniform(
        k_logits, (n_tasks + 1, n_splits * n_experts),
        minval=-0.001, maxval=0.001, dtype=jnp.float32)
    # add_expert sets the last row (unknown-task / average selector row) to zero.
    module_logits = module_logits.at[-1].set(0.0)

    # One task id per batch example, in [0, n_tasks].
    task_ids = jax.random.randint(k_ids, (batch,), 0, n_tasks + 1, dtype=jnp.int32)

    weights = poly_selector_forward(module_logits, task_ids, n_splits, n_experts)
    jax.block_until_ready(weights)

    ref = poly_selector_reference(module_logits, task_ids, n_splits, n_experts)
    assert weights.shape == (batch, n_splits, n_experts)
    assert jnp.allclose(weights, ref, atol=1e-5, rtol=1e-5)

    # n_tasks == 0 path: single row of logits, weights shared across the batch.
    w0 = poly_selector_forward(module_logits, jnp.zeros((1,), jnp.int32),
                               n_splits, n_experts)
    jax.block_until_ready(w0)
    shared_weights = jnp.squeeze(w0, axis=0)   # (n_splits, n_experts)
    assert shared_weights.shape == (n_splits, n_experts)

    # Multi-tile grid + tail padding path (batch not a multiple of the tile).
    batch2 = 200
    task_ids2 = jax.random.randint(k_ids2, (batch2,), 0, n_tasks + 1, dtype=jnp.int32)
    w2 = poly_selector_forward(module_logits, task_ids2, n_splits, n_experts,
                               block_batch=128)
    jax.block_until_ready(w2)
    ref2 = poly_selector_reference(module_logits, task_ids2, n_splits, n_experts)
    assert jnp.allclose(w2, ref2, atol=1e-5, rtol=1e-5)

    print("KERNEL_OK")
</pallas_src>

<mosaic_0001>
module attributes {stable_mosaic.version = 11 : i64} {
  func.func @_selector_kernel(%arg0: i32, %arg1: memref<1x128xi32, #tpu.memory_space<vmem>>, %arg2: memref<32x4xf32, #tpu.memory_space<vmem>>, %arg3: memref<32x128xf32, #tpu.memory_space<vmem>>) attributes {dimension_semantics = [#tpu.dimension_semantics<parallel>], iteration_bounds = array<i64: 1>, scalar_prefetch = 0 : i64, scratch_operands = 0 : i64, tpu.core_type = #tpu.core_type<tc>, window_params = [{transform_indices = @transform_0, window_bounds = array<i64: 1, 128>}, {pipeline_mode = #tpu.pipeline_mode<synchronous>, transform_indices = @transform_1, window_bounds = array<i64: 32, 4>}, {transform_indices = @transform_2, window_bounds = array<i64: 32, 128>}]} {
    %c0 = arith.constant 0 : index
    %c0_0 = arith.constant 0 : index
    %0 = vector.load %arg1[%c0, %c0_0] : memref<1x128xi32, #tpu.memory_space<vmem>>, vector<1x128xi32>
    %c0_1 = arith.constant 0 : index
    %c0_2 = arith.constant 0 : index
    %1 = vector.load %arg2[%c0_1, %c0_2] : memref<32x4xf32, #tpu.memory_space<vmem>>, vector<32x4xf32>
    %2 = tpu.iota {dimensions = array<i32: 0>} : vector<4x128xi32>
    %3 = vector.broadcast %0 : vector<1x128xi32> to vector<4x128xi32>
    %4 = arith.cmpi eq, %2, %3 : vector<4x128xi32>
    %5 = arith.extui %4 : vector<4x128xi1> to vector<4x128xi32>
    %6 = arith.sitofp %5 : vector<4x128xi32> to vector<4x128xf32>
    %cst = arith.constant dense<0.000000e+00> : vector<32x128xf32>
    %7 = tpu.matmul %1, %6, %cst {dimension_numbers = #tpu.dot_dimension_numbers<[1], [0], [0], [1], [0, 0, 1, 1], [], []>, precision = #tpu.contract_precision<fp32>} : vector<32x4xf32>, vector<4x128xf32>, vector<32x128xf32> -> vector<32x128xf32>
    %8 = arith.negf %7 : vector<32x128xf32>
    %9 = math.exp %8 : vector<32x128xf32>
    %cst_3 = arith.constant 1.000000e+00 : f32
    %10 = vector.broadcast %cst_3 : f32 to vector<32x128xf32>
    %11 = arith.addf %10, %9 : vector<32x128xf32>
    %12 = arith.divf %10, %11 : vector<32x128xf32>
    %13 = vector.shape_cast %12 : vector<32x128xf32> to vector<4x8x128xf32>
    %cst_4 = arith.constant dense<0.000000e+00> : vector<4x128xf32>
    %14 = vector.multi_reduction <add>, %13, %cst_4 [1] : vector<4x8x128xf32> to vector<4x128xf32>
    %15 = vector.shape_cast %14 : vector<4x128xf32> to vector<4x1x128xf32>
    %cst_5 = arith.constant 9.99999993E-9 : f32
    %16 = vector.broadcast %cst_5 : f32 to vector<4x1x128xf32>
    %17 = arith.addf %15, %16 : vector<4x1x128xf32>
    %18 = tpu.reciprocal %17 : vector<4x1x128xf32> -> vector<4x1x128xf32>
    %19 = vector.broadcast %18 : vector<4x1x128xf32> to vector<4x8x128xf32>
    %20 = arith.mulf %13, %19 : vector<4x8x128xf32>
    %21 = vector.shape_cast %20 : vector<4x8x128xf32> to vector<32x128xf32>
    %c0_6 = arith.constant 0 : index
    %c0_7 = arith.constant 0 : index
    %22 = vector.load %arg3[%c0_6, %c0_7] : memref<32x128xf32, #tpu.memory_space<vmem>>, vector<32x128xf32>
    tpu.vector_store %arg3[%c0_6, %c0_7], %21 {strides = array<i32>} : memref<32x128xf32, #tpu.memory_space<vmem>>, vector<32x128xf32>,
    return
  }
  func.func @transform_0(%arg0: i32) -> (i32, i32) {
    %c0_i32 = arith.constant 0 : i32
    %c0_i32_0 = arith.constant 0 : i32
    return %c0_i32, %arg0 : i32, i32
  }
  func.func @transform_1(%arg0: i32) -> (i32, i32) {
    %c0_i32 = arith.constant 0 : i32
    %c0_i32_0 = arith.constant 0 : i32
    %c0_i32_1 = arith.constant 0 : i32
    return %c0_i32, %c0_i32_0 : i32, i32
  }
  func.func @transform_2(%arg0: i32) -> (i32, i32) {
    %c0_i32 = arith.constant 0 : i32
    %c0_i32_0 = arith.constant 0 : i32
    return %c0_i32, %arg0 : i32, i32
  }
}

</mosaic_0001>

<llo_original>
// kernel: tpu_custom_call.1
$region0: #{tpu_custom_call.1}
  #allocation0 [shape = 'u32[]', space=smem, size = 0x4, offset = 0x4, fixed_abs, tag = 'smem constant byte address 0x4 - core index']
  #allocation1 [shape = 'u32[72,128]{1,0:T(1,128)}', space=vmem, size = 0x9000, scoped, tag = 'internal scratch']
  %s0 = inlined_call_operand.vmem [shape: s32[1,128], index: 0, kind: input, shape index: {}]
  %s1 = inlined_call_operand.vmem [shape: f32[32,4], index: 1, kind: input, shape index: {}]
  %s2 = inlined_call_operand.hbm [shape: f32[32,128], index: 2, kind: output, shape index: {}]
  %s3 = sld [smem:[#allocation0]]
  $region18: #{tpu_custom_call.1} parent=0
    _
  %s5 = ssub.s32 1, %s3
  %s6 = scalar_select 0, %s5, %s3
  $region1: #{tpu_custom_call.1} parent=0
    #allocation2 [shape = 'u8[16384]{0}', space=vmem, size = 0x4000, scoped, tag = 'output window, operand 0, single buffered']
    #allocation3 [shape = 's32[1]{0}', space=sflag, size = 0x4, scoped, tag = 'scoped memory for tpu_custom_call.1']
    %7 = vsyncpa [#allocation3], 0
    // Predicated region
    $region2: #{tpu_custom_call.1} parent=1 // pred_check
      _
    $region3: #{tpu_custom_call.1} parent=1 // pred_check_branch
      %9 = sbr.rel (0) target = $region5
    $region4: #{tpu_custom_call.1} parent=1 // pred_region
      _
    $region5: #{tpu_custom_call.1} parent=1 // pred_fallthru
      _
    // Predicated region
    $region6: #{tpu_custom_call.1} parent=1 // pred_check
      _
    $region7: #{tpu_custom_call.1} parent=1 // pred_check_branch
      %11 = sbr.rel (0) target = $region9
    $region8: #{tpu_custom_call.1} parent=1 // pred_region
      _
    $region9: #{tpu_custom_call.1} parent=1 // pred_fallthru
      _
    %v12 = vld [vmem:[%s0] sm:$0x1]
    %v13 = vld [vmem:[%s1] sm:$0xff]
    %v14 = vld [vmem:[%s1 + $0x8] sm:$0xff]
    %v15 = vld [vmem:[%s1 + $0x10] sm:$0xff]
    %v16 = vld [vmem:[%s1 + $0x18] sm:$0xff]
    %v17 = vlaneseq
    %v18 = vshrl.u32 %v17, 7
    %v19 = vperm.slane %v12, 0
    %vm20 = vcmp.eq.s32.totalorder %v18, %v19
    %v21 = vsel %vm20, 1, 0
    %v22 = vcvt.s32.f32 %v21
    %vm23 = vcmask 31744
    %v25 = vsel %vm23, %v13, 0
    %v28 = vsel %vm23, %v14, 0
    %v31 = vsel %vm23, %v15, 0
    %v34 = vsel %vm23, %v16, 0
    %vm36 = vcmask 1043456
    %v38 = vsel %vm36, %v22, 0
    %40 = vmatpush.msra.mxu0 0.0
    %41 = vmatpush.msra.mxu0 0.0
    %42 = vmatpush.msra.mxu0 0.0
    %43 = vmatpush.msra.mxu0 0.0
    %44 = vmatpush.msra.mxu0 0.0
    %45 = vmatpush.msra.mxu0 0.0
    %46 = vmatpush.msra.mxu0 0.0
    %47 = vmatpush.msra.mxu0 0.0
    %48 = vmatpush.msra.mxu0 0.0
    %49 = vmatpush.msra.mxu0 0.0
    %50 = vmatpush.msra.mxu0 0.0
    %51 = vmatpush.msra.mxu0 0.0
    %52 = vmatpush.msra.mxu0 0.0
    %53 = vmatpush.msra.mxu0 0.0
    %54 = vmatpush.msra.mxu0 0.0
    %v55 = vand.u32 %v38, 4294901760
    %56 = vmatpush.msra.mxu0 %v55
    %v57 = vand.u32 %v25, 4294901760
    %v58 = vsub.f32 %v25, %v57
    %v59 = vand.u32 %v58, 4294901760
    %v60 = vsub.f32 %v58, %v59
    %v61 = vand.u32 %v60, 4294901760
    %62 = vmatmul.f32.gmra.mxu0 %v61
    %v63 = vpop.f32.mrf.mxu0
    %v64 = vadd.f32 0.0, %v63
    %v65 = vand.u32 %v28, 4294901760
    %v66 = vsub.f32 %v28, %v65
    %v67 = vand.u32 %v66, 4294901760
    %v68 = vsub.f32 %v66, %v67
    %v69 = vand.u32 %v68, 4294901760
    %70 = vmatmul.f32.gmra.mxu0 %v69
    %v71 = vpop.f32.mrf.mxu0
    %v72 = vadd.f32 0.0, %v71
    %v73 = vand.u32 %v31, 4294901760
    %v74 = vsub.f32 %v31, %v73
    %v75 = vand.u32 %v74, 4294901760
    %v76 = vsub.f32 %v74, %v75
    %v77 = vand.u32 %v76, 4294901760
    %78 = vmatmul.f32.gmra.mxu0 %v77
    %v79 = vpop.f32.mrf.mxu0
    %v80 = vadd.f32 0.0, %v79
    %v81 = vand.u32 %v34, 4294901760
    %v82 = vsub.f32 %v34, %v81
    %v83 = vand.u32 %v82, 4294901760
    %v84 = vsub.f32 %v82, %v83
    %v85 = vand.u32 %v84, 4294901760
    %86 = vmatmul.f32.gmra.mxu0 %v85
    %v87 = vpop.f32.mrf.mxu0
    %v88 = vadd.f32 0.0, %v87
    %89 = vdwg.mxu0
    %90 = vmatpush.msra.mxu0 0.0
    %91 = vmatpush.msra.mxu0 0.0
    %92 = vmatpush.msra.mxu0 0.0
    %93 = vmatpush.msra.mxu0 0.0
    %94 = vmatpush.msra.mxu0 0.0
    %95 = vmatpush.msra.mxu0 0.0
    %96 = vmatpush.msra.mxu0 0.0
    %97 = vmatpush.msra.mxu0 0.0
    %98 = vmatpush.msra.mxu0 0.0
    %99 = vmatpush.msra.mxu0 0.0
    %100 = vmatpush.msra.mxu0 0.0
    %101 = vmatpush.msra.mxu0 0.0
    %102 = vmatpush.msra.mxu0 0.0
    %103 = vmatpush.msra.mxu0 0.0
    %104 = vmatpush.msra.mxu0 0.0
    %v105 = vand.u32 %v38, 4294901760
    %v106 = vsub.f32 %v38, %v105
    %v107 = vand.u32 %v106, 4294901760
    %v108 = vsub.f32 %v106, %v107
    %v109 = vand.u32 %v108, 4294901760
    %110 = vmatpush.msra.mxu0 %v109
    %v111 = vand.u32 %v25, 4294901760
    %112 = vmatmul.f32.gmra.mxu0 %v111
    %v113 = vpop.f32.mrf.mxu0
    %v114 = vadd.f32 %v64, %v113
    %v115 = vand.u32 %v28, 4294901760
    %116 = vmatmul.f32.gmra.mxu0 %v115
    %v117 = vpop.f32.mrf.mxu0
    %v118 = vadd.f32 %v72, %v117
    %v119 = vand.u32 %v31, 4294901760
    %120 = vmatmul.f32.gmra.mxu0 %v119
    %v121 = vpop.f32.mrf.mxu0
    %v122 = vadd.f32 %v80, %v121
    %v123 = vand.u32 %v34, 4294901760
    %124 = vmatmul.f32.gmra.mxu0 %v123
    %v125 = vpop.f32.mrf.mxu0
    %v126 = vadd.f32 %v88, %v125
    %127 = vdwg.mxu0
    %128 = vmatpush.msra.mxu0 0.0
    %129 = vmatpush.msra.mxu0 0.0
    %130 = vmatpush.msra.mxu0 0.0
    %131 = vmatpush.msra.mxu0 0.0
    %132 = vmatpush.msra.mxu0 0.0
    %133 = vmatpush.msra.mxu0 0.0
    %134 = vmatpush.msra.mxu0 0.0
    %135 = vmatpush.msra.mxu0 0.0
    %136 = vmatpush.msra.mxu0 0.0
    %137 = vmatpush.msra.mxu0 0.0
    %138 = vmatpush.msra.mxu0 0.0
    %139 = vmatpush.msra.mxu0 0.0
    %140 = vmatpush.msra.mxu0 0.0
    %141 = vmatpush.msra.mxu0 0.0
    %142 = vmatpush.msra.mxu0 0.0
    %v143 = vand.u32 %v38, 4294901760
    %v144 = vsub.f32 %v38, %v143
    %145 = vmatpush.msra.mxu0 %v144
    %v146 = vand.u32 %v25, 4294901760
    %v147 = vsub.f32 %v25, %v146
    %148 = vmatmul.f32.gmra.mxu0 %v147
    %v149 = vpop.f32.mrf.mxu0
    %v150 = vadd.f32 %v114, %v149
    %v151 = vand.u32 %v28, 4294901760
    %v152 = vsub.f32 %v28, %v151
    %153 = vmatmul.f32.gmra.mxu0 %v152
    %v154 = vpop.f32.mrf.mxu0
    %v155 = vadd.f32 %v118, %v154
    %v156 = vand.u32 %v31, 4294901760
    %v157 = vsub.f32 %v31, %v156
    %158 = vmatmul.f32.gmra.mxu0 %v157
    %v159 = vpop.f32.mrf.mxu0
    %v160 = vadd.f32 %v122, %v159
    %v161 = vand.u32 %v34, 4294901760
    %v162 = vsub.f32 %v34, %v161
    %163 = vmatmul.f32.gmra.mxu0 %v162
    %v164 = vpop.f32.mrf.mxu0
    %v165 = vadd.f32 %v126, %v164
    %166 = vdwg.mxu0
    %167 = vmatpush.msra.mxu0 0.0
    %168 = vmatpush.msra.mxu0 0.0
    %169 = vmatpush.msra.mxu0 0.0
    %170 = vmatpush.msra.mxu0 0.0
    %171 = vmatpush.msra.mxu0 0.0
    %172 = vmatpush.msra.mxu0 0.0
    %173 = vmatpush.msra.mxu0 0.0
    %174 = vmatpush.msra.mxu0 0.0
    %175 = vmatpush.msra.mxu0 0.0
    %176 = vmatpush.msra.mxu0 0.0
    %177 = vmatpush.msra.mxu0 0.0
    %178 = vmatpush.msra.mxu0 0.0
    %179 = vmatpush.msra.mxu0 0.0
    %180 = vmatpush.msra.mxu0 0.0
    %181 = vmatpush.msra.mxu0 0.0
    %v182 = vand.u32 %v38, 4294901760
    %183 = vmatpush.msra.mxu0 %v182
    %v184 = vand.u32 %v25, 4294901760
    %v185 = vsub.f32 %v25, %v184
    %v186 = vand.u32 %v185, 4294901760
    %187 = vmatmul.f32.gmra.mxu0 %v186
    %v188 = vpop.f32.mrf.mxu0
    %v189 = vadd.f32 %v150, %v188
    %v190 = vand.u32 %v28, 4294901760
    %v191 = vsub.f32 %v28, %v190
    %v192 = vand.u32 %v191, 4294901760
    %193 = vmatmul.f32.gmra.mxu0 %v192
    %v194 = vpop.f32.mrf.mxu0
    %v195 = vadd.f32 %v155, %v194
    %v196 = vand.u32 %v31, 4294901760
    %v197 = vsub.f32 %v31, %v196
    %v198 = vand.u32 %v197, 4294901760
    %199 = vmatmul.f32.gmra.mxu0 %v198
    %v200 = vpop.f32.mrf.mxu0
    %v201 = vadd.f32 %v160, %v200
    %v202 = vand.u32 %v34, 4294901760
    %v203 = vsub.f32 %v34, %v202
    %v204 = vand.u32 %v203, 4294901760
    %205 = vmatmul.f32.gmra.mxu0 %v204
    %v206 = vpop.f32.mrf.mxu0
    %v207 = vadd.f32 %v165, %v206
    %208 = vdwg.mxu0
    %209 = vmatpush.msra.mxu0 0.0
    %210 = vmatpush.msra.mxu0 0.0
    %211 = vmatpush.msra.mxu0 0.0
    %212 = vmatpush.msra.mxu0 0.0
    %213 = vmatpush.msra.mxu0 0.0
    %214 = vmatpush.msra.mxu0 0.0
    %215 = vmatpush.msra.mxu0 0.0
    %216 = vmatpush.msra.mxu0 0.0
    %217 = vmatpush.msra.mxu0 0.0
    %218 = vmatpush.msra.mxu0 0.0
    %219 = vmatpush.msra.mxu0 0.0
    %220 = vmatpush.msra.mxu0 0.0
    %221 = vmatpush.msra.mxu0 0.0
    %222 = vmatpush.msra.mxu0 0.0
    %223 = vmatpush.msra.mxu0 0.0
    %v224 = vand.u32 %v38, 4294901760
    %v225 = vsub.f32 %v38, %v224
    %v226 = vand.u32 %v225, 4294901760
    %227 = vmatpush.msra.mxu0 %v226
    %v228 = vand.u32 %v25, 4294901760
    %229 = vmatmul.f32.gmra.mxu0 %v228
    %v230 = vpop.f32.mrf.mxu0
    %v231 = vadd.f32 %v189, %v230
    %v232 = vand.u32 %v28, 4294901760
    %233 = vmatmul.f32.gmra.mxu0 %v232
    %v234 = vpop.f32.mrf.mxu0
    %v235 = vadd.f32 %v195, %v234
    %v236 = vand.u32 %v31, 4294901760
    %237 = vmatmul.f32.gmra.mxu0 %v236
    %v238 = vpop.f32.mrf.mxu0
    %v239 = vadd.f32 %v201, %v238
    %v240 = vand.u32 %v34, 4294901760
    %241 = vmatmul.f32.gmra.mxu0 %v240
    %v242 = vpop.f32.mrf.mxu0
    %v243 = vadd.f32 %v207, %v242
    %244 = vdwg.mxu0
    %245 = vmatpush.msra.mxu0 0.0
    %246 = vmatpush.msra.mxu0 0.0
    %247 = vmatpush.msra.mxu0 0.0
    %248 = vmatpush.msra.mxu0 0.0
    %249 = vmatpush.msra.mxu0 0.0
    %250 = vmatpush.msra.mxu0 0.0
    %251 = vmatpush.msra.mxu0 0.0
    %252 = vmatpush.msra.mxu0 0.0
    %253 = vmatpush.msra.mxu0 0.0
    %254 = vmatpush.msra.mxu0 0.0
    %255 = vmatpush.msra.mxu0 0.0
    %256 = vmatpush.msra.mxu0 0.0
    %257 = vmatpush.msra.mxu0 0.0
    %258 = vmatpush.msra.mxu0 0.0
    %259 = vmatpush.msra.mxu0 0.0
    %v260 = vand.u32 %v38, 4294901760
    %261 = vmatpush.msra.mxu0 %v260
    %v262 = vand.u32 %v25, 4294901760
    %263 = vmatmul.f32.gmra.mxu0 %v262
    %v264 = vpop.f32.mrf.mxu0
    %v265 = vadd.f32 %v231, %v264
    %v266 = vand.u32 %v28, 4294901760
    %267 = vmatmul.f32.gmra.mxu0 %v266
    %v268 = vpop.f32.mrf.mxu0
    %v269 = vadd.f32 %v235, %v268
    %v270 = vand.u32 %v31, 4294901760
    %271 = vmatmul.f32.gmra.mxu0 %v270
    %v272 = vpop.f32.mrf.mxu0
    %v273 = vadd.f32 %v239, %v272
    %v274 = vand.u32 %v34, 4294901760
    %275 = vmatmul.f32.gmra.mxu0 %v274
    %v276 = vpop.f32.mrf.mxu0
    %v277 = vadd.f32 %v243, %v276
    %278 = vdwg.mxu0
    %v279 = vxor.u32 %v265, 2147483648
    %v280 = vxor.u32 %v269, 2147483648
    %v281 = vxor.u32 %v273, 2147483648
    %v282 = vxor.u32 %v277, 2147483648
    %v283 = vmul.f32 %v279, 1.442695
    %v284 = vpow.pop %v283
    %v285 = vmul.f32 %v280, 1.442695
    %v286 = vpow.pop %v285
    %v287 = vmul.f32 %v281, 1.442695
    %v288 = vpow.pop %v287
    %v289 = vmul.f32 %v282, 1.442695
    %v290 = vpow.pop %v289
    %v291 = vadd.f32 %v284, 1.0
    %v292 = vadd.f32 %v286, 1.0
    %v293 = vadd.f32 %v288, 1.0
    %v294 = vadd.f32 %v290, 1.0
    %v295 = vrcp.pop %v291
    %v296 = vmul.f32 %v291, %v295
    %v297 = vsub.f32 1.0, %v296
    %v298 = vmul.f32 %v295, %v297
    %v299 = vadd.f32 %v295, %v298
    %vm300 = vweird.f32 %v291
    %vm301 = vweird.f32 %v295
    %vm302 = vmor %vm300, %vm301
    %v303 = vsel %vm302, %v295, %v299
    %v304 = vand.u32 2147483647, %v291
    %vm305 = vcmp.eq.f32.partialorder %v304, 8.507059e+37
    %v306 = vand.u32 %v291, 2147483648
    %v307 = vor.u32 1.1754944e-38, %v306
    %v308 = vsel %vm305, %v307, %v303
    %v309 = vmul.f32 1.0, %v308
    %v310 = vrcp.pop %v292
    %v311 = vmul.f32 %v292, %v310
    %v312 = vsub.f32 1.0, %v311
    %v313 = vmul.f32 %v310, %v312
    %v314 = vadd.f32 %v310, %v313
    %vm315 = vweird.f32 %v292
    %vm316 = vweird.f32 %v310
    %vm317 = vmor %vm315, %vm316
    %v318 = vsel %vm317, %v310, %v314
    %v319 = vand.u32 2147483647, %v292
    %vm320 = vcmp.eq.f32.partialorder %v319, 8.507059e+37
    %v321 = vand.u32 %v292, 2147483648
    %v322 = vor.u32 1.1754944e-38, %v321
    %v323 = vsel %vm320, %v322, %v318
    %v324 = vmul.f32 1.0, %v323
    %v325 = vrcp.pop %v293
    %v326 = vmul.f32 %v293, %v325
    %v327 = vsub.f32 1.0, %v326
    %v328 = vmul.f32 %v325, %v327
    %v329 = vadd.f32 %v325, %v328
    %vm330 = vweird.f32 %v293
    %vm331 = vweird.f32 %v325
    %vm332 = vmor %vm330, %vm331
    %v333 = vsel %vm332, %v325, %v329
    %v334 = vand.u32 2147483647, %v293
    %vm335 = vcmp.eq.f32.partialorder %v334, 8.507059e+37
    %v336 = vand.u32 %v293, 2147483648
    %v337 = vor.u32 1.1754944e-38, %v336
    %v338 = vsel %vm335, %v337, %v333
    %v339 = vmul.f32 1.0, %v338
    %v340 = vrcp.pop %v294
    %v341 = vmul.f32 %v294, %v340
    %v342 = vsub.f32 1.0, %v341
    %v343 = vmul.f32 %v340, %v342
    %v344 = vadd.f32 %v340, %v343
    %vm345 = vweird.f32 %v294
    %vm346 = vweird.f32 %v340
    %vm347 = vmor %vm345, %vm346
    %v348 = vsel %vm347, %v340, %v344
    %v349 = vand.u32 2147483647, %v294
    %vm350 = vcmp.eq.f32.partialorder %v349, 8.507059e+37
    %v351 = vand.u32 %v294, 2147483648
    %v352 = vor.u32 1.1754944e-38, %v351
    %v353 = vsel %vm350, %v352, %v348
    %v354 = vmul.f32 1.0, %v353
    %v355 = vrot.slane %v309, 4
    %v356 = vadd.f32 %v309, %v355
    %v357 = vrot.slane %v356, 2
    %v358 = vadd.f32 %v356, %v357
    %v359 = vrot.slane %v358, 1
    %v360 = vadd.f32 %v358, %v359
    %v361 = vrot.slane %v324, 4
    %v362 = vadd.f32 %v324, %v361
    %v363 = vrot.slane %v362, 2
    %v364 = vadd.f32 %v362, %v363
    %v365 = vrot.slane %v364, 1
    %v366 = vadd.f32 %v364, %v365
    %v367 = vrot.slane %v339, 4
    %v368 = vadd.f32 %v339, %v367
    %v369 = vrot.slane %v368, 2
    %v370 = vadd.f32 %v368, %v369
    %v371 = vrot.slane %v370, 1
    %v372 = vadd.f32 %v370, %v371
    %v373 = vrot.slane %v354, 4
    %v374 = vadd.f32 %v354, %v373
    %v375 = vrot.slane %v374, 2
    %v376 = vadd.f32 %v374, %v375
    %v377 = vrot.slane %v376, 1
    %v378 = vadd.f32 %v376, %v377
    %v379 = vadd.f32 %v360, 1e-08
    %v380 = vadd.f32 %v366, 1e-08
    %v381 = vadd.f32 %v372, 1e-08
    %v382 = vadd.f32 %v378, 1e-08
    %v383 = vrcp.pop %v379
    %v384 = vmul.f32 %v379, %v383
    %v385 = vsub.f32 1.0, %v384
    %v386 = vmul.f32 %v383, %v385
    %v387 = vadd.f32 %v383, %v386
    %vm388 = vweird.f32 %v379
    %vm389 = vweird.f32 %v383
    %vm390 = vmor %vm388, %vm389
    %v391 = vsel %vm390, %v383, %v387
    %v392 = vand.u32 2147483647, %v379
    %vm393 = vcmp.eq.f32.partialorder %v392, 8.507059e+37
    %v394 = vand.u32 %v379, 2147483648
    %v395 = vor.u32 1.1754944e-38, %v394
    %v396 = vsel %vm393, %v395, %v391
    %v397 = vrcp.pop %v380
    %v398 = vmul.f32 %v380, %v397
    %v399 = vsub.f32 1.0, %v398
    %v400 = vmul.f32 %v397, %v399
    %v401 = vadd.f32 %v397, %v400
    %vm402 = vweird.f32 %v380
    %vm403 = vweird.f32 %v397
    %vm404 = vmor %vm402, %vm403
    %v405 = vsel %vm404, %v397, %v401
    %v406 = vand.u32 2147483647, %v380
    %vm407 = vcmp.eq.f32.partialorder %v406, 8.507059e+37
    %v408 = vand.u32 %v380, 2147483648
    %v409 = vor.u32 1.1754944e-38, %v408
    %v410 = vsel %vm407, %v409, %v405
    %v411 = vrcp.pop %v381
    %v412 = vmul.f32 %v381, %v411
    %v413 = vsub.f32 1.0, %v412
    %v414 = vmul.f32 %v411, %v413
    %v415 = vadd.f32 %v411, %v414
    %vm416 = vweird.f32 %v381
    %vm417 = vweird.f32 %v411
    %vm418 = vmor %vm416, %vm417
    %v419 = vsel %vm418, %v411, %v415
    %v420 = vand.u32 2147483647, %v381
    %vm421 = vcmp.eq.f32.partialorder %v420, 8.507059e+37
    %v422 = vand.u32 %v381, 2147483648
    %v423 = vor.u32 1.1754944e-38, %v422
    %v424 = vsel %vm421, %v423, %v419
    %v425 = vrcp.pop %v382
    %v426 = vmul.f32 %v382, %v425
    %v427 = vsub.f32 1.0, %v426
    %v428 = vmul.f32 %v425, %v427
    %v429 = vadd.f32 %v425, %v428
    %vm430 = vweird.f32 %v382
    %vm431 = vweird.f32 %v425
    %vm432 = vmor %vm430, %vm431
    %v433 = vsel %vm432, %v425, %v429
    %v434 = vand.u32 2147483647, %v382
    %vm435 = vcmp.eq.f32.partialorder %v434, 8.507059e+37
    %v436 = vand.u32 %v382, 2147483648
    %v437 = vor.u32 1.1754944e-38, %v436
    %v438 = vsel %vm435, %v437, %v433
    %v439 = vmul.f32 %v309, %v396
    %v440 = vmul.f32 %v324, %v410
    %v441 = vmul.f32 %v339, %v424
    %v442 = vmul.f32 %v354, %v438
    %443 = vst [vmem:[#allocation2] sm:$0xff] %v439
    %444 = vst [vmem:[#allocation2 + $0x8] sm:$0xff] %v440
    %445 = vst [vmem:[#allocation2 + $0x10] sm:$0xff] %v441
    %446 = vst [vmem:[#allocation2 + $0x18] sm:$0xff] %v442
    // Predicated region
    $region10: #{tpu_custom_call.1} parent=1 // pred_check
      _
    $region11: #{tpu_custom_call.1} parent=1 // pred_check_branch
      %448 = sbr.rel (0) target = $region13
    $region12: #{tpu_custom_call.1} parent=1 // pred_region
      %450 = vsyncadd [#allocation3], 0
      %s451 = sshll.u32 [#allocation2], 4
      %s452 = int_to_ptr.vmem [resolvable:$true] %s451
      %s453 = sshll.u32 %s2, 4
      %s454 = int_to_ptr.hbm [resolvable:$true] %s453
      %459 = dma.vmem_to_hbm [thread:$0]  %s452, 512, %s454, [#allocation3], 128, 128, 8
    $region13: #{tpu_custom_call.1} parent=1 // pred_fallthru
      _
    // Predicated region
    $region14: #{tpu_custom_call.1} parent=1 // pred_check
      _
    $region15: #{tpu_custom_call.1} parent=1 // pred_check_branch
      %461 = sbr.rel (0) target = $region17
    $region16: #{tpu_custom_call.1} parent=1 // pred_region
      %463 = dma.done [#allocation3], 512
    $region17: #{tpu_custom_call.1} parent=1 // pred_fallthru
      _
    %464 = vsyncpa [#allocation3], 1

</llo_original>
